<compile_context>
chip_gen: v7x
topology: tpu7x:2x2x1
jax: 0.10.0
libtpu: 0.0.40
codegen_flags: <defaults>
</compile_context>

<pallas_src>
import jax
import jax.numpy as jnp
from jax import lax
from jax.experimental import pallas as pl
from jax.experimental.pallas import tpu as pltpu


def _round_up(x, m):
    return ((x + m - 1) // m) * m


def _recommender_kernel(uid_ref, mid_ref, ut_ref, mt_ref, b_ref, out_ref):
    # uid_ref/mid_ref : (1, S, TB) int32 ids for this batch tile (lane-dense TB)
    # ut_ref          : (Dp, NUp)  user table, transposed, zero-padded,
    #                              pre-scaled by the fc weight
    # mt_ref          : (Dp, NMp)  movie table, transposed, zero-padded
    # b_ref           : (1,)       fc bias, SMEM scalar
    # out_ref         : (1, TB)    predictions for this tile
    dp, nu = ut_ref.shape
    _, nm = mt_ref.shape
    _, s_len, tb = uid_ref.shape

    u_tbl = ut_ref[...]            # (Dp, NUp), VMEM-resident across the grid
    m_tbl = mt_ref[...]            # (Dp, NMp)
    uid_blk = uid_ref[0]           # (S, TB)
    mid_blk = mid_ref[0]           # (S, TB)

    # Hoisted iotas: JAX does not CSE broadcast_in_dim, so build them once.
    u_iota = lax.broadcasted_iota(jnp.int32, (nu, tb), 0)   # (NUp, TB)
    m_iota = lax.broadcasted_iota(jnp.int32, (nm, tb), 0)   # (NMp, TB)

    # Fused Dp reduction: only a (1, TB) accumulator stays live.
    pred = jnp.zeros((1, tb), jnp.float32)
    for s in range(s_len):         # S is small & static (typically 1)
        uids = uid_blk[s:s + 1, :]                           # (1, TB)
        mids = mid_blk[s:s + 1, :]                           # (1, TB)
        # One-hot gather on the MXU: onehot[r, t] = (r == ids[t]).
        u_oh = (u_iota == uids).astype(jnp.float32)          # (NUp, TB)
        m_oh = (m_iota == mids).astype(jnp.float32)          # (NMp, TB)
        u_rows = jnp.dot(u_tbl, u_oh,
                         preferred_element_type=jnp.float32)  # (Dp, TB)
        m_rows = jnp.dot(m_tbl, m_oh,
                         preferred_element_type=jnp.float32)  # (Dp, TB)
        # fc weight already folded into u_tbl; padded lanes contribute 0.
        pred = pred + jnp.sum(u_rows * m_rows, axis=0, keepdims=True)

    out_ref[...] = (pred + b_ref[0]).astype(out_ref.dtype)


def prepare_recommender_params(user_emb, movie_emb, fc_w, fc_b):
    """One-time (per model) preprocessing: transpose, pad, fold fc weight.

    Keep the returned arrays cached across forward calls — this is the
    expensive HBM transpose/copy of the embedding tables.
    """
    NU, D = user_emb.shape
    NM, D2 = movie_emb.shape
    assert D == D2

    Dp = _round_up(D, 128)
    NUp = _round_up(NU, 128)
    NMp = _round_up(NM, 128)

    w_row = fc_w.reshape(1, D).astype(jnp.float32)           # (1, D)
    u_scaled = user_emb.astype(jnp.float32) * w_row           # fold fc weight

    ut = jnp.zeros((Dp, NUp), jnp.float32).at[:D, :NU].set(u_scaled.T)
    mt = jnp.zeros((Dp, NMp), jnp.float32).at[:D, :NM].set(
        movie_emb.astype(jnp.float32).T)
    b_vec = fc_b.reshape(1).astype(jnp.float32)
    return ut, mt, b_vec


def recommender_forward(user_id, movie_id, ut, mt, b_vec, *, tile_b=256):
    B, S = user_id.shape
    Dp, NUp = ut.shape
    _, NMp = mt.shape

    # Batch tile: at least 128 (lane width), at most tile_b.
    TB = min(tile_b, _round_up(max(B, 1), 128))
    Bp = _round_up(B, TB)
    n_tiles = Bp // TB

    # Ids, padded along batch (padded rows point at row 0 and are discarded),
    # laid out as (n_tiles, S, TB) so the batch dim is lane-dense in-kernel.
    # NOTE: out-of-range ids (>= vocab) yield an all-zero one-hot column
    # (prediction == bias) rather than an error as nn.Embedding would raise.
    def tile_ids(ids):
        ids = ids.astype(jnp.int32)
        ids = jnp.zeros((Bp, S), jnp.int32).at[:B].set(ids)
        return ids.reshape(n_tiles, TB, S).transpose(0, 2, 1)

    uid_t = tile_ids(user_id)
    mid_t = tile_ids(movie_id)

    # Explicit VMEM budget: resident tables single-buffered, id/out tiles
    # double-buffered, plus one-hot / gathered-row working space.
    table_bytes = 4 * Dp * (NUp + NMp)
    ids_bytes = 2 * 2 * 4 * S * TB
    out_bytes = 2 * 4 * TB
    work_bytes = 4 * TB * (NUp + NMp + 2 * Dp + 8)
    vmem_limit = int(min(64 * 1024 * 1024,          # fits every generation
                         max(32 * 1024 * 1024,
                             2 * (table_bytes + ids_bytes
                                  + out_bytes + work_bytes))))

    out = pl.pallas_call(
        _recommender_kernel,
        out_shape=jax.ShapeDtypeStruct((n_tiles, TB), jnp.float32),
        grid=(n_tiles,),
        in_specs=[
            pl.BlockSpec((1, S, TB), lambda t: (t, 0, 0)),    # user ids tile
            pl.BlockSpec((1, S, TB), lambda t: (t, 0, 0)),    # movie ids tile
            pl.BlockSpec((Dp, NUp), lambda t: (0, 0),         # resident table
                         pipeline_mode=pl.Buffered(1)),       #  (single-buffered)
            pl.BlockSpec((Dp, NMp), lambda t: (0, 0),
                         pipeline_mode=pl.Buffered(1)),
            pl.BlockSpec(memory_space=pltpu.MemorySpace.SMEM),  # fc bias scalar
        ],
        out_specs=pl.BlockSpec((1, TB), lambda t: (t, 0)),
        compiler_params=pltpu.CompilerParams(
            dimension_semantics=("parallel",),
            vmem_limit_bytes=vmem_limit),
    )(uid_t, mid_t, ut, mt, b_vec)

    preds = out.reshape(Bp)[:B]
    return jnp.squeeze(preds.reshape(B, 1))   # matches prediction.squeeze()


if __name__ == "__main__":
    key = jax.random.PRNGKey(0)
    num_users, num_movies, D = 64, 48, 50     # embedding_dim=50 (module default)
    B, S = 8, 1

    k1, k2, k3, k4, k5, k6 = jax.random.split(key, 6)
    # nn.Embedding default init: N(0, 1)
    user_emb = jax.random.normal(k1, (num_users, D), jnp.float32)
    movie_emb = jax.random.normal(k2, (num_movies, D), jnp.float32)
    # nn.Linear default init: U(-1/sqrt(D), 1/sqrt(D))
    bound = 1.0 / (D ** 0.5)
    fc_w = jax.random.uniform(k3, (1, D), jnp.float32, -bound, bound)
    fc_b = jax.random.uniform(k4, (1,), jnp.float32, -bound, bound)

    user_id = jax.random.randint(k5, (B, S), 0, num_users, jnp.int32)
    movie_id = jax.random.randint(k6, (B, S), 0, num_movies, jnp.int32)

    # One-time table prep (cached across calls); jitted forward on top.
    ut, mt, b_vec = prepare_recommender_params(user_emb, movie_emb, fc_w, fc_b)
    ut, mt, b_vec = jax.block_until_ready((ut, mt, b_vec))
    fwd = jax.jit(recommender_forward)

    pred = fwd(user_id, movie_id, ut, mt, b_vec)
    pred = jax.block_until_ready(pred)

    # pure-JAX reference of the PyTorch forward
    uvec = user_emb[user_id]                    # (B, S, D)
    mvec = movie_emb[movie_id]                  # (B, S, D)
    pooled = (uvec * mvec).sum(axis=1)          # (B, D)
    ref = jnp.squeeze(pooled @ fc_w.reshape(1, D).T + fc_b)

    assert pred.shape == ref.shape, (pred.shape, ref.shape)
    assert jnp.allclose(pred, ref, atol=1e-4, rtol=1e-4), (pred, ref)
    print("KERNEL_OK")
</pallas_src>

<mosaic_0001>
module attributes {stable_mosaic.version = 11 : i64} {
  func.func @_recommender_kernel(%arg0: i32, %arg1: memref<1x1x128xi32, #tpu.memory_space<vmem>>, %arg2: memref<1x1x128xi32, #tpu.memory_space<vmem>>, %arg3: memref<128x128xf32, #tpu.memory_space<vmem>>, %arg4: memref<128x128xf32, #tpu.memory_space<vmem>>, %arg5: memref<1xf32, #tpu.memory_space<smem>>, %arg6: memref<1x128xf32, #tpu.memory_space<vmem>>) attributes {dimension_semantics = [#tpu.dimension_semantics<parallel>], iteration_bounds = array<i64: 1>, scalar_prefetch = 0 : i64, scratch_operands = 0 : i64, tpu.core_type = #tpu.core_type<tc>, window_params = [{transform_indices = @transform_0, window_bounds = array<i64: 1, 1, 128>}, {transform_indices = @transform_1, window_bounds = array<i64: 1, 1, 128>}, {pipeline_mode = #tpu.pipeline_mode<synchronous>, transform_indices = @transform_2, window_bounds = array<i64: 128, 128>}, {pipeline_mode = #tpu.pipeline_mode<synchronous>, transform_indices = @transform_3, window_bounds = array<i64: 128, 128>}, {transform_indices = @transform_4, window_bounds = array<i64: 1>}, {transform_indices = @transform_5, window_bounds = array<i64: 1, 128>}]} {
    %c0 = arith.constant 0 : index
    %c0_0 = arith.constant 0 : index
    %0 = vector.load %arg3[%c0, %c0_0] : memref<128x128xf32, #tpu.memory_space<vmem>>, vector<128x128xf32>
    %c0_1 = arith.constant 0 : index
    %c0_2 = arith.constant 0 : index
    %1 = vector.load %arg4[%c0_1, %c0_2] : memref<128x128xf32, #tpu.memory_space<vmem>>, vector<128x128xf32>
    %c0_3 = arith.constant 0 : index
    %c0_4 = arith.constant 0 : index
    %c0_5 = arith.constant 0 : index
    %2 = vector.load %arg1[%c0_3, %c0_4, %c0_5] : memref<1x1x128xi32, #tpu.memory_space<vmem>>, vector<1x1x128xi32>
    %3 = vector.shape_cast %2 : vector<1x1x128xi32> to vector<1x128xi32>
    %c0_6 = arith.constant 0 : index
    %c0_7 = arith.constant 0 : index
    %c0_8 = arith.constant 0 : index
    %4 = vector.load %arg2[%c0_6, %c0_7, %c0_8] : memref<1x1x128xi32, #tpu.memory_space<vmem>>, vector<1x1x128xi32>
    %5 = vector.shape_cast %4 : vector<1x1x128xi32> to vector<1x128xi32>
    %6 = tpu.iota {dimensions = array<i32: 0>} : vector<128x128xi32>
    %7 = tpu.iota {dimensions = array<i32: 0>} : vector<128x128xi32>
    %cst = arith.constant 0.000000e+00 : f32
    %8 = vector.broadcast %cst : f32 to vector<1x128xf32>
    %9 = vector.broadcast %3 : vector<1x128xi32> to vector<128x128xi32>
    %10 = arith.cmpi eq, %6, %9 : vector<128x128xi32>
    %11 = arith.extui %10 : vector<128x128xi1> to vector<128x128xi32>
    %12 = arith.sitofp %11 : vector<128x128xi32> to vector<128x128xf32>
    %13 = vector.broadcast %5 : vector<1x128xi32> to vector<128x128xi32>
    %14 = arith.cmpi eq, %7, %13 : vector<128x128xi32>
    %15 = arith.extui %14 : vector<128x128xi1> to vector<128x128xi32>
    %16 = arith.sitofp %15 : vector<128x128xi32> to vector<128x128xf32>
    %cst_9 = arith.constant dense<0.000000e+00> : vector<128x128xf32>
    %17 = tpu.matmul %0, %12, %cst_9 {dimension_numbers = #tpu.dot_dimension_numbers<[1], [0], [0], [1], [0, 0, 1, 1], [], []>} : vector<128x128xf32>, vector<128x128xf32>, vector<128x128xf32> -> vector<128x128xf32>
    %cst_10 = arith.constant dense<0.000000e+00> : vector<128x128xf32>
    %18 = tpu.matmul %1, %16, %cst_10 {dimension_numbers = #tpu.dot_dimension_numbers<[1], [0], [0], [1], [0, 0, 1, 1], [], []>} : vector<128x128xf32>, vector<128x128xf32>, vector<128x128xf32> -> vector<128x128xf32>
    %19 = arith.mulf %17, %18 : vector<128x128xf32>
    %cst_11 = arith.constant dense<0.000000e+00> : vector<128xf32>
    %20 = vector.multi_reduction <add>, %19, %cst_11 [0] : vector<128x128xf32> to vector<128xf32>
    %21 = vector.shape_cast %20 : vector<128xf32> to vector<1x128xf32>
    %22 = arith.addf %8, %21 : vector<1x128xf32>
    %c0_12 = arith.constant 0 : index
    %23 = memref.load %arg5[%c0_12] : memref<1xf32, #tpu.memory_space<smem>>
    %24 = vector.broadcast %23 : f32 to vector<1x128xf32>
    %25 = arith.addf %22, %24 : vector<1x128xf32>
    %c0_13 = arith.constant 0 : index
    %c0_14 = arith.constant 0 : index
    %26 = vector.load %arg6[%c0_13, %c0_14] : memref<1x128xf32, #tpu.memory_space<vmem>>, vector<1x128xf32>
    tpu.vector_store %arg6[%c0_13, %c0_14], %25 {strides = array<i32>} : memref<1x128xf32, #tpu.memory_space<vmem>>, vector<1x128xf32>,
    return
  }
  func.func @transform_0(%arg0: i32) -> (i32, i32, i32) {
    %c0_i32 = arith.constant 0 : i32
    %c0_i32_0 = arith.constant 0 : i32
    %c0_i32_1 = arith.constant 0 : i32
    return %arg0, %c0_i32, %c0_i32_0 : i32, i32, i32
  }
  func.func @transform_1(%arg0: i32) -> (i32, i32, i32) {
    %c0_i32 = arith.constant 0 : i32
    %c0_i32_0 = arith.constant 0 : i32
    %c0_i32_1 = arith.constant 0 : i32
    return %arg0, %c0_i32, %c0_i32_0 : i32, i32, i32
  }
  func.func @transform_2(%arg0: i32) -> (i32, i32) {
    %c0_i32 = arith.constant 0 : i32
    %c0_i32_0 = arith.constant 0 : i32
    %c0_i32_1 = arith.constant 0 : i32
    return %c0_i32, %c0_i32_0 : i32, i32
  }
  func.func @transform_3(%arg0: i32) -> (i32, i32) {
    %c0_i32 = arith.constant 0 : i32
    %c0_i32_0 = arith.constant 0 : i32
    %c0_i32_1 = arith.constant 0 : i32
    return %c0_i32, %c0_i32_0 : i32, i32
  }
  func.func @transform_4(%arg0: i32) -> i32 {
    %c0_i32 = arith.constant 0 : i32
    %c0_i32_0 = arith.constant 0 : i32
    return %c0_i32 : i32
  }
  func.func @transform_5(%arg0: i32) -> (i32, i32) {
    %c0_i32 = arith.constant 0 : i32
    %c0_i32_0 = arith.constant 0 : i32
    return %arg0, %c0_i32 : i32, i32
  }
}

</mosaic_0001>

<llo_original>
// kernel: recommender_forward.1
$region0: #{recommender_forward.1}
  #allocation0 [shape = 'u32[]', space=smem, size = 0x4, offset = 0x4, fixed_abs, tag = 'smem constant byte address 0x4 - core index']
  #allocation1 [shape = 'u32[144,128]{1,0:T(1,128)}', space=vmem, size = 0x12000, scoped, tag = 'internal scratch']
  #allocation2 [shape = 'f32[1]{0:T(128)S(6)}', space=smem, size = 0x200, scoped, tag = 'scoped memory for recommender_forward.1']
  %s0 = inlined_call_operand.vmem [shape: s32[1,1,128], index: 0, kind: input, shape index: {}]
  %s1 = inlined_call_operand.vmem [shape: s32[1,1,128], index: 1, kind: input, shape index: {}]
  %s2 = inlined_call_operand.hbm [shape: f32[128,128], index: 2, kind: input, shape index: {}]
  %s3 = inlined_call_operand.hbm [shape: f32[128,128], index: 3, kind: input, shape index: {}]
  %s4 = inlined_call_operand.<no memory space> [shape: f32[1], index: 4, kind: input, shape index: {}]
  %s5 = inlined_call_operand.vmem [shape: f32[1,128], index: 5, kind: output, shape index: {}]
  %s6 = sld [smem:[#allocation0]]
  $region38: #{recommender_forward.1} parent=0
    _
  %s8 = ssub.s32 1, %s6
  %s9 = scalar_select 0, %s8, %s6
  %10 = sst [smem:[#allocation2]] %s4
  $region1: #{recommender_forward.1} parent=0
    #allocation3 [shape = 'u8[65536]{0}', space=vmem, size = 0x10000, scoped, tag = 'input window, operand 2, single buffered']
    #allocation4 [shape = 's32[1]{0}', space=sflag, size = 0x4, scoped, tag = 'scoped memory for recommender_forward.1']
    #allocation5 [shape = 'u8[65536]{0}', space=vmem, size = 0x10000, scoped, tag = 'input window, operand 3, single buffered']
    #allocation6 [shape = 's32[1]{0}', space=sflag, size = 0x4, scoped, tag = 'scoped memory for recommender_forward.1']
    %11 = vsyncpa [#allocation4], 0
    %12 = vsyncpa [#allocation6], 0
    // Predicated region
    $region2: #{recommender_forward.1} parent=1 // pred_check
      _
    $region3: #{recommender_forward.1} parent=1 // pred_check_branch
      %14 = sbr.rel (0) target = $region5
    $region4: #{recommender_forward.1} parent=1 // pred_region
      _
    $region5: #{recommender_forward.1} parent=1 // pred_fallthru
      _
    // Predicated region
    $region6: #{recommender_forward.1} parent=1 // pred_check
      _
    $region7: #{recommender_forward.1} parent=1 // pred_check_branch
      %16 = sbr.rel (0) target = $region9
    $region8: #{recommender_forward.1} parent=1 // pred_region
      _
    $region9: #{recommender_forward.1} parent=1 // pred_fallthru
      _
    // Predicated region
    $region10: #{recommender_forward.1} parent=1 // pred_check
      _
    $region11: #{recommender_forward.1} parent=1 // pred_check_branch
      %18 = sbr.rel (0) target = $region13
    $region12: #{recommender_forward.1} parent=1 // pred_region
      %s20 = ssub.s32 2048, 2048
      %21 = vsyncadd [#allocation4], %s20
      %s22 = sshll.u32 [#allocation3], 4
      %s23 = int_to_ptr.vmem [resolvable:$true] %s22
      %28 = dma.hbm_to_vmem [thread:$0]  %s2, 2048, %s23, [#allocation4], 128, 128, 8
    $region13: #{recommender_forward.1} parent=1 // pred_fallthru
      _
    // Predicated region
    $region14: #{recommender_forward.1} parent=1 // pred_check
      _
    $region15: #{recommender_forward.1} parent=1 // pred_check_branch
      %30 = sbr.rel (0) target = $region17
    $region16: #{recommender_forward.1} parent=1 // pred_region
      %s32 = ssub.s32 2048, 2048
      %33 = vsyncadd [#allocation6], %s32
      %s34 = sshll.u32 [#allocation5], 4
      %s35 = int_to_ptr.vmem [resolvable:$true] %s34
      %40 = dma.hbm_to_vmem [thread:$0]  %s3, 2048, %s35, [#allocation6], 128, 128, 8
    $region17: #{recommender_forward.1} parent=1 // pred_fallthru
      _
    // Predicated region
    $region18: #{recommender_forward.1} parent=1 // pred_check
      _
    $region19: #{recommender_forward.1} parent=1 // pred_check_branch
      %42 = sbr.rel (0) target = $region21
    $region20: #{recommender_forward.1} parent=1 // pred_region
      _
    $region21: #{recommender_forward.1} parent=1 // pred_fallthru
      _
    // Predicated region
    $region22: #{recommender_forward.1} parent=1 // pred_check
      _
    $region23: #{recommender_forward.1} parent=1 // pred_check_branch
      %44 = sbr.rel (0) target = $region25
    $region24: #{recommender_forward.1} parent=1 // pred_region
      %45 = dma.done [#allocation4], 2048
    $region25: #{recommender_forward.1} parent=1 // pred_fallthru
      _
    // Predicated region
    $region26: #{recommender_forward.1} parent=1 // pred_check
      _
    $region27: #{recommender_forward.1} parent=1 // pred_check_branch
      %47 = sbr.rel (0) target = $region29
    $region28: #{recommender_forward.1} parent=1 // pred_region
      %48 = dma.done [#allocation6], 2048
    $region29: #{recommender_forward.1} parent=1 // pred_fallthru
      _
    %v49 = vld [vmem:[#allocation3] sm:$0xff]
    %v50 = vld [vmem:[#allocation3 + $0x8] sm:$0xff]
    %v51 = vld [vmem:[#allocation3 + $0x10] sm:$0xff]
    %v52 = vld [vmem:[#allocation3 + $0x18] sm:$0xff]
    %v53 = vld [vmem:[#allocation3 + $0x20] sm:$0xff]
    %v54 = vld [vmem:[#allocation3 + $0x28] sm:$0xff]
    %v55 = vld [vmem:[#allocation3 + $0x30] sm:$0xff]
    %v56 = vld [vmem:[#allocation3 + $0x38] sm:$0xff]
    %v57 = vld [vmem:[#allocation3 + $0x40] sm:$0xff]
    %v58 = vld [vmem:[#allocation3 + $0x48] sm:$0xff]
    %v59 = vld [vmem:[#allocation3 + $0x50] sm:$0xff]
    %v60 = vld [vmem:[#allocation3 + $0x58] sm:$0xff]
    %v61 = vld [vmem:[#allocation3 + $0x60] sm:$0xff]
    %v62 = vld [vmem:[#allocation3 + $0x68] sm:$0xff]
    %v63 = vld [vmem:[#allocation3 + $0x70] sm:$0xff]
    %v64 = vld [vmem:[#allocation3 + $0x78] sm:$0xff]
    %v65 = vld [vmem:[#allocation5] sm:$0xff]
    %v66 = vld [vmem:[#allocation5 + $0x8] sm:$0xff]
    %v67 = vld [vmem:[#allocation5 + $0x10] sm:$0xff]
    %v68 = vld [vmem:[#allocation5 + $0x18] sm:$0xff]
    %v69 = vld [vmem:[#allocation5 + $0x20] sm:$0xff]
    %v70 = vld [vmem:[#allocation5 + $0x28] sm:$0xff]
    %v71 = vld [vmem:[#allocation5 + $0x30] sm:$0xff]
    %v72 = vld [vmem:[#allocation5 + $0x38] sm:$0xff]
    %v73 = vld [vmem:[#allocation5 + $0x40] sm:$0xff]
    %v74 = vld [vmem:[#allocation5 + $0x48] sm:$0xff]
    %v75 = vld [vmem:[#allocation5 + $0x50] sm:$0xff]
    %v76 = vld [vmem:[#allocation5 + $0x58] sm:$0xff]
    %v77 = vld [vmem:[#allocation5 + $0x60] sm:$0xff]
    %v78 = vld [vmem:[#allocation5 + $0x68] sm:$0xff]
    %v79 = vld [vmem:[#allocation5 + $0x70] sm:$0xff]
    %v80 = vld [vmem:[#allocation5 + $0x78] sm:$0xff]
    %v81 = vld [vmem:[%s0] sm:$0x1]
    %v82 = vld [vmem:[%s1] sm:$0x1]
    %v83 = vlaneseq
    %v84 = vshrl.u32 %v83, 7
    %v85 = vadd.s32 %v84, 8
    %v86 = vadd.s32 %v84, 16
    %v87 = vadd.s32 %v84, 24
    %v88 = vadd.s32 %v84, 32
    %v89 = vadd.s32 %v84, 40
    %v90 = vadd.s32 %v84, 48
    %v91 = vadd.s32 %v84, 56
    %v92 = vadd.s32 %v84, 64
    %v93 = vadd.s32 %v84, 72
    %v94 = vadd.s32 %v84, 80
    %v95 = vadd.s32 %v84, 88
    %v96 = vadd.s32 %v84, 96
    %v97 = vadd.s32 %v84, 104
    %v98 = vadd.s32 %v84, 112
    %v99 = vadd.s32 %v84, 120
    %v100 = vlaneseq
    %v101 = vshrl.u32 %v100, 7
    %v102 = vsub.s32 0, %v101
    %v103 = vrot.slane %v81, %v102
    %vm104 = vcmp.eq.s32.totalorder %v84, %v103
    %vm105 = vcmp.eq.s32.totalorder %v85, %v103
    %vm106 = vcmp.eq.s32.totalorder %v86, %v103
    %vm107 = vcmp.eq.s32.totalorder %v87, %v103
    %vm108 = vcmp.eq.s32.totalorder %v88, %v103
    %vm109 = vcmp.eq.s32.totalorder %v89, %v103
    %vm110 = vcmp.eq.s32.totalorder %v90, %v103
    %vm111 = vcmp.eq.s32.totalorder %v91, %v103
    %vm112 = vcmp.eq.s32.totalorder %v92, %v103
    %vm113 = vcmp.eq.s32.totalorder %v93, %v103
    %vm114 = vcmp.eq.s32.totalorder %v94, %v103
    %vm115 = vcmp.eq.s32.totalorder %v95, %v103
    %vm116 = vcmp.eq.s32.totalorder %v96, %v103
    %vm117 = vcmp.eq.s32.totalorder %v97, %v103
    %vm118 = vcmp.eq.s32.totalorder %v98, %v103
    %vm119 = vcmp.eq.s32.totalorder %v99, %v103
    %v120 = vsel %vm104, 1, 0
    %v121 = vsel %vm105, 1, 0
    %v122 = vsel %vm106, 1, 0
    %v123 = vsel %vm107, 1, 0
    %v124 = vsel %vm108, 1, 0
    %v125 = vsel %vm109, 1, 0
    %v126 = vsel %vm110, 1, 0
    %v127 = vsel %vm111, 1, 0
    %v128 = vsel %vm112, 1, 0
    %v129 = vsel %vm113, 1, 0
    %v130 = vsel %vm114, 1, 0
    %v131 = vsel %vm115, 1, 0
    %v132 = vsel %vm116, 1, 0
    %v133 = vsel %vm117, 1, 0
    %v134 = vsel %vm118, 1, 0
    %v135 = vsel %vm119, 1, 0
    %v136 = vcvt.s32.f32 %v120
    %v137 = vcvt.s32.f32 %v121
    %v138 = vcvt.s32.f32 %v122
    %v139 = vcvt.s32.f32 %v123
    %v140 = vcvt.s32.f32 %v124
    %v141 = vcvt.s32.f32 %v125
    %v142 = vcvt.s32.f32 %v126
    %v143 = vcvt.s32.f32 %v127
    %v144 = vcvt.s32.f32 %v128
    %v145 = vcvt.s32.f32 %v129
    %v146 = vcvt.s32.f32 %v130
    %v147 = vcvt.s32.f32 %v131
    %v148 = vcvt.s32.f32 %v132
    %v149 = vcvt.s32.f32 %v133
    %v150 = vcvt.s32.f32 %v134
    %v151 = vcvt.s32.f32 %v135
    %v152 = vlaneseq
    %v153 = vshrl.u32 %v152, 7
    %v154 = vsub.s32 0, %v153
    %v155 = vrot.slane %v82, %v154
    %vm156 = vcmp.eq.s32.totalorder %v84, %v155
    %vm157 = vcmp.eq.s32.totalorder %v85, %v155
    %vm158 = vcmp.eq.s32.totalorder %v86, %v155
    %vm159 = vcmp.eq.s32.totalorder %v87, %v155
    %vm160 = vcmp.eq.s32.totalorder %v88, %v155
    %vm161 = vcmp.eq.s32.totalorder %v89, %v155
    %vm162 = vcmp.eq.s32.totalorder %v90, %v155
    %vm163 = vcmp.eq.s32.totalorder %v91, %v155
    %vm164 = vcmp.eq.s32.totalorder %v92, %v155
    %vm165 = vcmp.eq.s32.totalorder %v93, %v155
    %vm166 = vcmp.eq.s32.totalorder %v94, %v155
    %vm167 = vcmp.eq.s32.totalorder %v95, %v155
    %vm168 = vcmp.eq.s32.totalorder %v96, %v155
    %vm169 = vcmp.eq.s32.totalorder %v97, %v155
    %vm170 = vcmp.eq.s32.totalorder %v98, %v155
    %vm171 = vcmp.eq.s32.totalorder %v99, %v155
    %v172 = vsel %vm156, 1, 0
    %v173 = vsel %vm157, 1, 0
    %v174 = vsel %vm158, 1, 0
    %v175 = vsel %vm159, 1, 0
    %v176 = vsel %vm160, 1, 0
    %v177 = vsel %vm161, 1, 0
    %v178 = vsel %vm162, 1, 0
    %v179 = vsel %vm163, 1, 0
    %v180 = vsel %vm164, 1, 0
    %v181 = vsel %vm165, 1, 0
    %v182 = vsel %vm166, 1, 0
    %v183 = vsel %vm167, 1, 0
    %v184 = vsel %vm168, 1, 0
    %v185 = vsel %vm169, 1, 0
    %v186 = vsel %vm170, 1, 0
    %v187 = vsel %vm171, 1, 0
    %v188 = vcvt.s32.f32 %v172
    %v189 = vcvt.s32.f32 %v173
    %v190 = vcvt.s32.f32 %v174
    %v191 = vcvt.s32.f32 %v175
    %v192 = vcvt.s32.f32 %v176
    %v193 = vcvt.s32.f32 %v177
    %v194 = vcvt.s32.f32 %v178
    %v195 = vcvt.s32.f32 %v179
    %v196 = vcvt.s32.f32 %v180
    %v197 = vcvt.s32.f32 %v181
    %v198 = vcvt.s32.f32 %v182
    %v199 = vcvt.s32.f32 %v183
    %v200 = vcvt.s32.f32 %v184
    %v201 = vcvt.s32.f32 %v185
    %v202 = vcvt.s32.f32 %v186
    %v203 = vcvt.s32.f32 %v187
    %204 = vmatprep.subr.mxu0 0.0
    %205 = vmatpush1.msra.mxu0 %v136
    %206 = vmatprep.subr.mxu0 0.0
    %207 = vmatpush1.msra.mxu0 %v137
    %208 = vmatprep.subr.mxu0 0.0
    %209 = vmatpush1.msra.mxu0 %v138
    %210 = vmatprep.subr.mxu0 0.0
    %211 = vmatpush1.msra.mxu0 %v139
    %212 = vmatprep.subr.mxu0 0.0
    %213 = vmatpush1.msra.mxu0 %v140
    %214 = vmatprep.subr.mxu0 0.0
    %215 = vmatpush1.msra.mxu0 %v141
    %216 = vmatprep.subr.mxu0 0.0
    %217 = vmatpush1.msra.mxu0 %v142
    %218 = vmatprep.subr.mxu0 0.0
    %219 = vmatpush1.msra.mxu0 %v143
    %220 = vmatprep.subr.mxu0 0.0
    %221 = vmatpush1.msra.mxu0 %v144
    %222 = vmatprep.subr.mxu0 0.0
    %223 = vmatpush1.msra.mxu0 %v145
    %224 = vmatprep.subr.mxu0 0.0
    %225 = vmatpush1.msra.mxu0 %v146
    %226 = vmatprep.subr.mxu0 0.0
    %227 = vmatpush1.msra.mxu0 %v147
    %228 = vmatprep.subr.mxu0 0.0
    %229 = vmatpush1.msra.mxu0 %v148
    %230 = vmatprep.subr.mxu0 0.0
    %231 = vmatpush1.msra.mxu0 %v149
    %232 = vmatprep.subr.mxu0 0.0
    %233 = vmatpush1.msra.mxu0 %v150
    %234 = vmatprep.subr.mxu0 0.0
    %235 = vmatpush1.msra.mxu0 %v151
    %236 = vmatprep.subr.mxu0 0.0
    %237 = vmatpush1.msra.mxu0 0.0
    %238 = vmatprep.subr.mxu0 0.0
    %239 = vmatpush1.msra.mxu0 0.0
    %240 = vmatprep.subr.mxu0 0.0
    %241 = vmatpush1.msra.mxu0 0.0
    %242 = vmatprep.subr.mxu0 0.0
    %243 = vmatpush1.msra.mxu0 0.0
    %244 = vmatprep.subr.mxu0 0.0
    %245 = vmatpush1.msra.mxu0 0.0
    %246 = vmatprep.subr.mxu0 0.0
    %247 = vmatpush1.msra.mxu0 0.0
    %248 = vmatprep.subr.mxu0 0.0
    %249 = vmatpush1.msra.mxu0 0.0
    %250 = vmatprep.subr.mxu0 0.0
    %251 = vmatpush1.msra.mxu0 0.0
    %252 = vmatprep.subr.mxu0 0.0
    %253 = vmatpush1.msra.mxu0 0.0
    %254 = vmatprep.subr.mxu0 0.0
    %255 = vmatpush1.msra.mxu0 0.0
    %256 = vmatprep.subr.mxu0 0.0
    %257 = vmatpush1.msra.mxu0 0.0
    %258 = vmatprep.subr.mxu0 0.0
    %259 = vmatpush1.msra.mxu0 0.0
    %260 = vmatprep.subr.mxu0 0.0
    %261 = vmatpush1.msra.mxu0 0.0
    %262 = vmatprep.subr.mxu0 0.0
    %263 = vmatpush1.msra.mxu0 0.0
    %264 = vmatprep.subr.mxu0 0.0
    %265 = vmatpush1.msra.mxu0 0.0
    %266 = vmatprep.subr.mxu0 0.0
    %267 = vmatpush1.msra.mxu0 0.0
    %268 = vmatprep.mubr.f32.mxu0 0.0
    %269 = vmatmul.mubr.f32.gmra.mrb[0].mxu0 %v49
    %v270 = vpop.f32.mrb[0].mxu0
    %v271 = vadd.f32 0.0, %v270
    %v272 = vpop.f32.mrb[0].mxu0
    %273 = vmatprep.mubr.f32.mxu0 0.0
    %274 = vmatmul.mubr.f32.gmra.mrb[0].mxu0 %v50
    %v275 = vpop.f32.mrb[0].mxu0
    %v276 = vadd.f32 0.0, %v275
    %v277 = vpop.f32.mrb[0].mxu0
    %278 = vmatprep.mubr.f32.mxu0 0.0
    %279 = vmatmul.mubr.f32.gmra.mrb[0].mxu0 %v51
    %v280 = vpop.f32.mrb[0].mxu0
    %v281 = vadd.f32 0.0, %v280
    %v282 = vpop.f32.mrb[0].mxu0
    %283 = vmatprep.mubr.f32.mxu0 0.0
    %284 = vmatmul.mubr.f32.gmra.mrb[0].mxu0 %v52
    %v285 = vpop.f32.mrb[0].mxu0
    %v286 = vadd.f32 0.0, %v285
    %v287 = vpop.f32.mrb[0].mxu0
    %288 = vmatprep.mubr.f32.mxu0 0.0
    %289 = vmatmul.mubr.f32.gmra.mrb[0].mxu0 %v53
    %v290 = vpop.f32.mrb[0].mxu0
    %v291 = vadd.f32 0.0, %v290
    %v292 = vpop.f32.mrb[0].mxu0
    %293 = vmatprep.mubr.f32.mxu0 0.0
    %294 = vmatmul.mubr.f32.gmra.mrb[0].mxu0 %v54
    %v295 = vpop.f32.mrb[0].mxu0
    %v296 = vadd.f32 0.0, %v295
    %v297 = vpop.f32.mrb[0].mxu0
    %298 = vmatprep.mubr.f32.mxu0 0.0
    %299 = vmatmul.mubr.f32.gmra.mrb[0].mxu0 %v55
    %v300 = vpop.f32.mrb[0].mxu0
    %v301 = vadd.f32 0.0, %v300
    %v302 = vpop.f32.mrb[0].mxu0
    %303 = vmatprep.mubr.f32.mxu0 0.0
    %304 = vmatmul.mubr.f32.gmra.mrb[0].mxu0 %v56
    %v305 = vpop.f32.mrb[0].mxu0
    %v306 = vadd.f32 0.0, %v305
    %v307 = vpop.f32.mrb[0].mxu0
    %308 = vmatprep.mubr.f32.mxu0 0.0
    %309 = vmatmul.mubr.f32.gmra.mrb[0].mxu0 %v57
    %v310 = vpop.f32.mrb[0].mxu0
    %v311 = vadd.f32 0.0, %v310
    %v312 = vpop.f32.mrb[0].mxu0
    %313 = vmatprep.mubr.f32.mxu0 0.0
    %314 = vmatmul.mubr.f32.gmra.mrb[0].mxu0 %v58
    %v315 = vpop.f32.mrb[0].mxu0
    %v316 = vadd.f32 0.0, %v315
    %v317 = vpop.f32.mrb[0].mxu0
    %318 = vmatprep.mubr.f32.mxu0 0.0
    %319 = vmatmul.mubr.f32.gmra.mrb[0].mxu0 %v59
    %v320 = vpop.f32.mrb[0].mxu0
    %v321 = vadd.f32 0.0, %v320
    %v322 = vpop.f32.mrb[0].mxu0
    %323 = vmatprep.mubr.f32.mxu0 0.0
    %324 = vmatmul.mubr.f32.gmra.mrb[0].mxu0 %v60
    %v325 = vpop.f32.mrb[0].mxu0
    %v326 = vadd.f32 0.0, %v325
    %v327 = vpop.f32.mrb[0].mxu0
    %328 = vmatprep.mubr.f32.mxu0 0.0
    %329 = vmatmul.mubr.f32.gmra.mrb[0].mxu0 %v61
    %v330 = vpop.f32.mrb[0].mxu0
    %v331 = vadd.f32 0.0, %v330
    %v332 = vpop.f32.mrb[0].mxu0
    %333 = vmatprep.mubr.f32.mxu0 0.0
    %334 = vmatmul.mubr.f32.gmra.mrb[0].mxu0 %v62
    %v335 = vpop.f32.mrb[0].mxu0
    %v336 = vadd.f32 0.0, %v335
    %v337 = vpop.f32.mrb[0].mxu0
    %338 = vmatprep.mubr.f32.mxu0 0.0
    %339 = vmatmul.mubr.f32.gmra.mrb[0].mxu0 %v63
    %v340 = vpop.f32.mrb[0].mxu0
    %v341 = vadd.f32 0.0, %v340
    %v342 = vpop.f32.mrb[0].mxu0
    %343 = vmatprep.mubr.f32.mxu0 0.0
    %344 = vmatmul.mubr.f32.gmra.mrb[0].mxu0 %v64
    %v345 = vpop.f32.mrb[0].mxu0
    %v346 = vadd.f32 0.0, %v345
    %v347 = vpop.f32.mrb[0].mxu0
    %348 = vdwg.mxu0
    %349 = vmatprep.subr.mxu0 0.0
    %350 = vmatpush1.msra.mxu0 %v188
    %351 = vmatprep.subr.mxu0 0.0
    %352 = vmatpush1.msra.mxu0 %v189
    %353 = vmatprep.subr.mxu0 0.0
    %354 = vmatpush1.msra.mxu0 %v190
    %355 = vmatprep.subr.mxu0 0.0
    %356 = vmatpush1.msra.mxu0 %v191
    %357 = vmatprep.subr.mxu0 0.0
    %358 = vmatpush1.msra.mxu0 %v192
    %359 = vmatprep.subr.mxu0 0.0
    %360 = vmatpush1.msra.mxu0 %v193
    %361 = vmatprep.subr.mxu0 0.0
    %362 = vmatpush1.msra.mxu0 %v194
    %363 = vmatprep.subr.mxu0 0.0
    %364 = vmatpush1.msra.mxu0 %v195
    %365 = vmatprep.subr.mxu0 0.0
    %366 = vmatpush1.msra.mxu0 %v196
    %367 = vmatprep.subr.mxu0 0.0
    %368 = vmatpush1.msra.mxu0 %v197
    %369 = vmatprep.subr.mxu0 0.0
    %370 = vmatpush1.msra.mxu0 %v198
    %371 = vmatprep.subr.mxu0 0.0
    %372 = vmatpush1.msra.mxu0 %v199
    %373 = vmatprep.subr.mxu0 0.0
    %374 = vmatpush1.msra.mxu0 %v200
    %375 = vmatprep.subr.mxu0 0.0
    %376 = vmatpush1.msra.mxu0 %v201
    %377 = vmatprep.subr.mxu0 0.0
    %378 = vmatpush1.msra.mxu0 %v202
    %379 = vmatprep.subr.mxu0 0.0
    %380 = vmatpush1.msra.mxu0 %v203
    %381 = vmatprep.subr.mxu0 0.0
    %382 = vmatpush1.msra.mxu0 0.0
    %383 = vmatprep.subr.mxu0 0.0
    %384 = vmatpush1.msra.mxu0 0.0
    %385 = vmatprep.subr.mxu0 0.0
    %386 = vmatpush1.msra.mxu0 0.0
    %387 = vmatprep.subr.mxu0 0.0
    %388 = vmatpush1.msra.mxu0 0.0
    %389 = vmatprep.subr.mxu0 0.0
    %390 = vmatpush1.msra.mxu0 0.0
    %391 = vmatprep.subr.mxu0 0.0
    %392 = vmatpush1.msra.mxu0 0.0
    %393 = vmatprep.subr.mxu0 0.0
    %394 = vmatpush1.msra.mxu0 0.0
    %395 = vmatprep.subr.mxu0 0.0
    %396 = vmatpush1.msra.mxu0 0.0
    %397 = vmatprep.subr.mxu0 0.0
    %398 = vmatpush1.msra.mxu0 0.0
    %399 = vmatprep.subr.mxu0 0.0
    %400 = vmatpush1.msra.mxu0 0.0
    %401 = vmatprep.subr.mxu0 0.0
    %402 = vmatpush1.msra.mxu0 0.0
    %403 = vmatprep.subr.mxu0 0.0
    %404 = vmatpush1.msra.mxu0 0.0
    %405 = vmatprep.subr.mxu0 0.0
    %406 = vmatpush1.msra.mxu0 0.0
    %407 = vmatprep.subr.mxu0 0.0
    %408 = vmatpush1.msra.mxu0 0.0
    %409 = vmatprep.subr.mxu0 0.0
    %410 = vmatpush1.msra.mxu0 0.0
    %411 = vmatprep.subr.mxu0 0.0
    %412 = vmatpush1.msra.mxu0 0.0
    %413 = vmatprep.mubr.f32.mxu0 0.0
    %414 = vmatmul.mubr.f32.gmra.mrb[0].mxu0 %v65
    %v415 = vpop.f32.mrb[0].mxu0
    %v416 = vadd.f32 0.0, %v415
    %v417 = vpop.f32.mrb[0].mxu0
    %418 = vmatprep.mubr.f32.mxu0 0.0
    %419 = vmatmul.mubr.f32.gmra.mrb[0].mxu0 %v66
    %v420 = vpop.f32.mrb[0].mxu0
    %v421 = vadd.f32 0.0, %v420
    %v422 = vpop.f32.mrb[0].mxu0
    %423 = vmatprep.mubr.f32.mxu0 0.0
    %424 = vmatmul.mubr.f32.gmra.mrb[0].mxu0 %v67
    %v425 = vpop.f32.mrb[0].mxu0
    %v426 = vadd.f32 0.0, %v425
    %v427 = vpop.f32.mrb[0].mxu0
    %428 = vmatprep.mubr.f32.mxu0 0.0
    %429 = vmatmul.mubr.f32.gmra.mrb[0].mxu0 %v68
    %v430 = vpop.f32.mrb[0].mxu0
    %v431 = vadd.f32 0.0, %v430
    %v432 = vpop.f32.mrb[0].mxu0
    %433 = vmatprep.mubr.f32.mxu0 0.0
    %434 = vmatmul.mubr.f32.gmra.mrb[0].mxu0 %v69
    %v435 = vpop.f32.mrb[0].mxu0
    %v436 = vadd.f32 0.0, %v435
    %v437 = vpop.f32.mrb[0].mxu0
    %438 = vmatprep.mubr.f32.mxu0 0.0
    %439 = vmatmul.mubr.f32.gmra.mrb[0].mxu0 %v70
    %v440 = vpop.f32.mrb[0].mxu0
    %v441 = vadd.f32 0.0, %v440
    %v442 = vpop.f32.mrb[0].mxu0
    %443 = vmatprep.mubr.f32.mxu0 0.0
    %444 = vmatmul.mubr.f32.gmra.mrb[0].mxu0 %v71
    %v445 = vpop.f32.mrb[0].mxu0
    %v446 = vadd.f32 0.0, %v445
    %v447 = vpop.f32.mrb[0].mxu0
    %448 = vmatprep.mubr.f32.mxu0 0.0
    %449 = vmatmul.mubr.f32.gmra.mrb[0].mxu0 %v72
    %v450 = vpop.f32.mrb[0].mxu0
    %v451 = vadd.f32 0.0, %v450
    %v452 = vpop.f32.mrb[0].mxu0
    %453 = vmatprep.mubr.f32.mxu0 0.0
    %454 = vmatmul.mubr.f32.gmra.mrb[0].mxu0 %v73
    %v455 = vpop.f32.mrb[0].mxu0
    %v456 = vadd.f32 0.0, %v455
    %v457 = vpop.f32.mrb[0].mxu0
    %458 = vmatprep.mubr.f32.mxu0 0.0
    %459 = vmatmul.mubr.f32.gmra.mrb[0].mxu0 %v74
    %v460 = vpop.f32.mrb[0].mxu0
    %v461 = vadd.f32 0.0, %v460
    %v462 = vpop.f32.mrb[0].mxu0
    %463 = vmatprep.mubr.f32.mxu0 0.0
    %464 = vmatmul.mubr.f32.gmra.mrb[0].mxu0 %v75
    %v465 = vpop.f32.mrb[0].mxu0
    %v466 = vadd.f32 0.0, %v465
    %v467 = vpop.f32.mrb[0].mxu0
    %468 = vmatprep.mubr.f32.mxu0 0.0
    %469 = vmatmul.mubr.f32.gmra.mrb[0].mxu0 %v76
    %v470 = vpop.f32.mrb[0].mxu0
    %v471 = vadd.f32 0.0, %v470
    %v472 = vpop.f32.mrb[0].mxu0
    %473 = vmatprep.mubr.f32.mxu0 0.0
    %474 = vmatmul.mubr.f32.gmra.mrb[0].mxu0 %v77
    %v475 = vpop.f32.mrb[0].mxu0
    %v476 = vadd.f32 0.0, %v475
    %v477 = vpop.f32.mrb[0].mxu0
    %478 = vmatprep.mubr.f32.mxu0 0.0
    %479 = vmatmul.mubr.f32.gmra.mrb[0].mxu0 %v78
    %v480 = vpop.f32.mrb[0].mxu0
    %v481 = vadd.f32 0.0, %v480
    %v482 = vpop.f32.mrb[0].mxu0
    %483 = vmatprep.mubr.f32.mxu0 0.0
    %484 = vmatmul.mubr.f32.gmra.mrb[0].mxu0 %v79
    %v485 = vpop.f32.mrb[0].mxu0
    %v486 = vadd.f32 0.0, %v485
    %v487 = vpop.f32.mrb[0].mxu0
    %488 = vmatprep.mubr.f32.mxu0 0.0
    %489 = vmatmul.mubr.f32.gmra.mrb[0].mxu0 %v80
    %v490 = vpop.f32.mrb[0].mxu0
    %v491 = vadd.f32 0.0, %v490
    %v492 = vpop.f32.mrb[0].mxu0
    %493 = vdwg.mxu0
    %v494 = vmul.f32 %v271, %v416
    %v495 = vmul.f32 %v276, %v421
    %v496 = vmul.f32 %v281, %v426
    %v497 = vmul.f32 %v286, %v431
    %v498 = vmul.f32 %v291, %v436
    %v499 = vmul.f32 %v296, %v441
    %v500 = vmul.f32 %v301, %v446
    %v501 = vmul.f32 %v306, %v451
    %v502 = vmul.f32 %v311, %v456
    %v503 = vmul.f32 %v316, %v461
    %v504 = vmul.f32 %v321, %v466
    %v505 = vmul.f32 %v326, %v471
    %v506 = vmul.f32 %v331, %v476
    %v507 = vmul.f32 %v336, %v481
    %v508 = vmul.f32 %v341, %v486
    %v509 = vmul.f32 %v346, %v491
    %v510 = vadd.f32 %v494, %v495
    %v511 = vadd.f32 %v510, %v496
    %v512 = vadd.f32 %v511, %v497
    %v513 = vadd.f32 %v512, %v498
    %v514 = vadd.f32 %v513, %v499
    %v515 = vadd.f32 %v514, %v500
    %v516 = vadd.f32 %v515, %v501
    %v517 = vadd.f32 %v516, %v502
    %v518 = vadd.f32 %v517, %v503
    %v519 = vadd.f32 %v518, %v504
    %v520 = vadd.f32 %v519, %v505
    %v521 = vadd.f32 %v520, %v506
    %v522 = vadd.f32 %v521, %v507
    %v523 = vadd.f32 %v522, %v508
    %v524 = vadd.f32 %v523, %v509
    %v525 = vrot.slane %v524, 4
    %v526 = vadd.f32 %v524, %v525
    %v527 = vrot.slane %v526, 2
    %v528 = vadd.f32 %v526, %v527
    %v529 = vrot.slane %v528, 1
    %v530 = vadd.f32 %v528, %v529
    %v531 = vadd.f32 %v530, 0.0
    %s532 = sld [smem:[#allocation2]]
    %v533 = vstv %s532
    %v534 = vadd.f32 %v531, %v533
    %535 = vst [vmem:[%s5] sm:$0x1] %v534
    // Predicated region
    $region30: #{recommender_forward.1} parent=1 // pred_check
      _
    $region31: #{recommender_forward.1} parent=1 // pred_check_branch
      %537 = sbr.rel (0) target = $region33
    $region32: #{recommender_forward.1} parent=1 // pred_region
      _
    $region33: #{recommender_forward.1} parent=1 // pred_fallthru
      _
    // Predicated region
    $region34: #{recommender_forward.1} parent=1 // pred_check
      _
    $region35: #{recommender_forward.1} parent=1 // pred_check_branch
      %539 = sbr.rel (0) target = $region37
    $region36: #{recommender_forward.1} parent=1 // pred_region
      _
    $region37: #{recommender_forward.1} parent=1 // pred_fallthru
      _
    %540 = vsyncpa [#allocation4], 1
    %541 = vsyncpa [#allocation6], 1

</llo_original>
